<compile_context>
chip_gen: v6e
topology: v6e:2x2x1
jax: 0.10.0
libtpu: 0.0.40
codegen_flags: <defaults>
</compile_context>

<pallas_src>
import functools

import jax
import jax.numpy as jnp
from jax import lax
from jax.experimental import pallas as pl
from jax.experimental.pallas import tpu as pltpu

LANES = 128
TARGET_BLOCK_BYTES = 2 * 1024 * 1024   # per input, per pipeline buffer
CHUNK_ROWS = 512                       # in-kernel accumulation chunk (mult. of 8/16/32)
MAX_SPLITS = 2                         # megacore splits on v7x; harmless elsewhere


def _sublane(dtype):
    # f32 -> 8, bf16/f16 -> 16, int8/fp8 -> 32 sublane packing tile.
    return max(8, 32 // jnp.dtype(dtype).itemsize)


def _charbonnier_block_kernel(x_ref, y_ref, out_ref, *, eps, chunk_rows):
    """Accumulate sum(sqrt((x-y)^2 + eps)) over one (block_rows, 128) block into
    a vreg-shaped (8, 128) f32 partial-sum block resident across grid axis 1."""

    @pl.when(pl.program_id(1) == 0)
    def _():
        out_ref[...] = jnp.zeros_like(out_ref)

    block_rows = x_ref.shape[0]
    n_chunks = block_rows // chunk_rows
    eps32 = jnp.float32(eps)

    def body(c, acc):
        r = pl.multiple_of(c * chunk_rows, chunk_rows)
        xd = x_ref[pl.ds(r, chunk_rows), :].astype(jnp.float32)
        yd = y_ref[pl.ds(r, chunk_rows), :].astype(jnp.float32)
        d = xd - yd
        err = jnp.sqrt(d * d + eps32)
        # (chunk,128) -> (chunk//8, 8, 128) groups whole (8,128) tiles, so the
        # reshape is layout-preserving and the axis-0 sum is plain VPU vadds.
        return acc + jnp.sum(err.reshape(chunk_rows // 8, 8, LANES), axis=0)

    acc = lax.fori_loop(0, n_chunks, body, jnp.zeros((8, LANES), jnp.float32))
    out_ref[...] += acc


def _jnp_partial_sum(x_flat, y_flat, eps32):
    d = x_flat.astype(jnp.float32) - y_flat.astype(jnp.float32)
    return jnp.sum(jnp.sqrt(d * d + eps32), dtype=jnp.float32)


def charbonnier_loss(x, y, eps=1e-6):
    """Pallas TPU implementation of CharbonnierLoss.forward(X, Y)."""
    assert x.shape == y.shape
    n = x.size
    eps32 = jnp.float32(eps)

    xf = jnp.reshape(x, (-1,))
    yf = jnp.reshape(y, (-1,))

    sub = max(_sublane(x.dtype), _sublane(y.dtype))
    itemsize = max(jnp.dtype(x.dtype).itemsize, jnp.dtype(y.dtype).itemsize)
    max_block_rows = max(
        CHUNK_ROWS,
        (TARGET_BLOCK_BYTES // (LANES * itemsize) // CHUNK_ROWS) * CHUNK_ROWS,
    )

    rows_avail = n // LANES  # complete 128-element rows available without padding

    # Row quantum for kernel blocks: full 512-row chunks when possible,
    # otherwise the dtype packing tile (single-chunk block).
    if rows_avail >= CHUNK_ROWS:
        chunk_rows = CHUNK_ROWS
    else:
        chunk_rows = (rows_avail // sub) * sub

    main_rows = 0
    main_sum = jnp.float32(0.0)

    if chunk_rows > 0:
        block_rows = min(max_block_rows, (rows_avail // chunk_rows) * chunk_rows)
        n_blocks = rows_avail // block_rows
        n_splits = min(MAX_SPLITS, n_blocks)
        n_blocks = (n_blocks // n_splits) * n_splits
        steps = n_blocks // n_splits
        main_rows = n_blocks * block_rows

        if n % LANES == 0:
            # Free bitcast reshape; the grid just covers the first main_rows rows.
            x2 = xf.reshape(n // LANES, LANES)
            y2 = yf.reshape(n // LANES, LANES)
        else:
            # Non-lane-aligned total size: one prefix-slice copy (only case
            # where any extra HBM traffic proportional to the input remains).
            x2 = xf[: main_rows * LANES].reshape(main_rows, LANES)
            y2 = yf[: main_rows * LANES].reshape(main_rows, LANES)

        blk = pl.BlockSpec((block_rows, LANES), lambda s, i: (s * steps + i, 0))

        partials = pl.pallas_call(
            functools.partial(
                _charbonnier_block_kernel, eps=eps, chunk_rows=chunk_rows
            ),
            out_shape=jax.ShapeDtypeStruct((n_splits * 8, LANES), jnp.float32),
            grid_spec=pltpu.PrefetchScalarGridSpec(
                num_scalar_prefetch=0,
                grid=(n_splits, steps),
                in_specs=[blk, blk],
                out_specs=pl.BlockSpec((8, LANES), lambda s, i: (s, 0)),
            ),
            compiler_params=pltpu.CompilerParams(
                dimension_semantics=("parallel", "arbitrary")
            ),
        )(x2, y2)

        main_sum = jnp.sum(partials, dtype=jnp.float32)

    # Tail: everything the kernel grid did not cover (< ~2 blocks + <128 elems).
    total = main_sum
    tail_start = main_rows * LANES
    if tail_start < n:
        total = total + _jnp_partial_sum(xf[tail_start:], yf[tail_start:], eps32)

    return total / jnp.float32(n)


if __name__ == "__main__":
    key = jax.random.PRNGKey(0)
    kx, ky = jax.random.split(key)

    loss_fn = jax.jit(charbonnier_loss, static_argnames=("eps",))

    def ref_loss(a, b, eps):
        d = a.astype(jnp.float32) - b.astype(jnp.float32)
        return jnp.mean(jnp.sqrt(d * d + jnp.float32(eps)))

    # 1) Primary demo: NCHW (batch=2, channels=4, 16x16 spatial), f32,
    #    lane-aligned -> fully zero-copy kernel path.
    X = jax.random.normal(kx, (2, 4, 16, 16), dtype=jnp.float32)
    Y = jax.random.normal(ky, (2, 4, 16, 16), dtype=jnp.float32)
    loss = loss_fn(X, Y, eps=1e-6)
    jax.block_until_ready(loss)
    assert jnp.allclose(loss, ref_loss(X, Y, 1e-6), rtol=1e-4, atol=1e-5), loss

    # 2) Non-lane-aligned odd shape: exercises prefix-slice path + jnp tail.
    kx2, ky2 = jax.random.split(ky)
    X2 = jax.random.normal(kx2, (3, 5, 37, 53), dtype=jnp.float32)
    Y2 = jax.random.normal(ky2, (3, 5, 37, 53), dtype=jnp.float32)
    loss2 = loss_fn(X2, Y2, eps=1e-6)
    jax.block_until_ready(loss2)
    assert jnp.allclose(loss2, ref_loss(X2, Y2, 1e-6), rtol=1e-4, atol=1e-5), loss2

    # 3) Larger input: exercises 2-way parallel split + uncovered-row tail.
    kx3, ky3 = jax.random.split(ky2)
    X3 = jax.random.normal(kx3, (2, 4, 512, 320), dtype=jnp.float32)
    Y3 = jax.random.normal(ky3, (2, 4, 512, 320), dtype=jnp.float32)
    loss3 = loss_fn(X3, Y3, eps=1e-6)
    jax.block_until_ready(loss3)
    assert jnp.allclose(loss3, ref_loss(X3, Y3, 1e-6), rtol=1e-4, atol=1e-5), loss3

    # 4) bf16 input: exercises the dtype-aware (16,128) sublane rounding.
    kx4, ky4 = jax.random.split(ky3)
    X4 = jax.random.normal(kx4, (2, 4, 64, 64), dtype=jnp.bfloat16)
    Y4 = jax.random.normal(ky4, (2, 4, 64, 64), dtype=jnp.bfloat16)
    loss4 = loss_fn(X4, Y4, eps=1e-6)
    jax.block_until_ready(loss4)
    assert jnp.allclose(loss4, ref_loss(X4, Y4, 1e-6), rtol=1e-3, atol=1e-4), loss4

    print("KERNEL_OK")
</pallas_src>

<mosaic_0001>
module attributes {stable_mosaic.version = 11 : i64} {
  func.func @_charbonnier_block_kernel(%arg0: i32, %arg1: i32, %arg2: memref<16x128xf32, #tpu.memory_space<vmem>>, %arg3: memref<16x128xf32, #tpu.memory_space<vmem>>, %arg4: memref<8x128xf32, #tpu.memory_space<vmem>>) attributes {dimension_semantics = [#tpu.dimension_semantics<parallel>, #tpu.dimension_semantics<arbitrary>], iteration_bounds = array<i64: 1, 1>, scalar_prefetch = 0 : i64, scratch_operands = 0 : i64, tpu.core_type = #tpu.core_type<tc>, window_params = [{transform_indices = @transform_0, window_bounds = array<i64: 16, 128>}, {transform_indices = @transform_1, window_bounds = array<i64: 16, 128>}, {transform_indices = @transform_2, window_bounds = array<i64: 8, 128>}]} {
    %c0_i32 = arith.constant 0 : i32
    %0 = arith.cmpi eq, %arg1, %c0_i32 : i32
    %1 = arith.extui %0 : i1 to i32
    %c0_i32_0 = arith.constant 0 : i32
    %2 = arith.cmpi ne, %1, %c0_i32_0 : i32
    scf.if %2 {
      %cst_9 = arith.constant 0.000000e+00 : f32
      %21 = vector.broadcast %cst_9 : f32 to vector<8x128xf32>
      %c0_10 = arith.constant 0 : index
      %c0_11 = arith.constant 0 : index
      %22 = vector.load %arg4[%c0_10, %c0_11] : memref<8x128xf32, #tpu.memory_space<vmem>>, vector<8x128xf32>
      tpu.vector_store %arg4[%c0_10, %c0_11], %21 {strides = array<i32>} : memref<8x128xf32, #tpu.memory_space<vmem>>, vector<8x128xf32>,
    } else {
    }
    %cst = arith.constant 0.000000e+00 : f32
    %3 = vector.broadcast %cst : f32 to vector<8x128xf32>
    %cst_1 = arith.constant 9.99999997E-7 : f32
    %c0_i32_2 = arith.constant 0 : i32
    %c16_i32 = arith.constant 16 : i32
    %4 = arith.muli %c0_i32_2, %c16_i32 : i32
    %5 = tpu.assume_multiple %4, 16 : i32
    %6 = arith.index_cast %5 : i32 to index
    %c0 = arith.constant 0 : index
    %7 = vector.load %arg2[%6, %c0] : memref<16x128xf32, #tpu.memory_space<vmem>>, vector<16x128xf32>
    %8 = arith.index_cast %5 : i32 to index
    %c0_3 = arith.constant 0 : index
    %9 = vector.load %arg3[%8, %c0_3] : memref<16x128xf32, #tpu.memory_space<vmem>>, vector<16x128xf32>
    %10 = arith.subf %7, %9 : vector<16x128xf32>
    %11 = arith.mulf %10, %10 : vector<16x128xf32>
    %12 = vector.broadcast %cst_1 : f32 to vector<16x128xf32>
    %13 = arith.addf %11, %12 : vector<16x128xf32>
    %14 = math.sqrt %13 : vector<16x128xf32>
    %15 = vector.shape_cast %14 : vector<16x128xf32> to vector<2x8x128xf32>
    %cst_4 = arith.constant dense<0.000000e+00> : vector<8x128xf32>
    %16 = vector.multi_reduction <add>, %15, %cst_4 [0] : vector<2x8x128xf32> to vector<8x128xf32>
    %17 = arith.addf %3, %16 : vector<8x128xf32>
    %c1_i32 = arith.constant 1 : i32
    %c0_5 = arith.constant 0 : index
    %c0_6 = arith.constant 0 : index
    %18 = vector.load %arg4[%c0_5, %c0_6] : memref<8x128xf32, #tpu.memory_space<vmem>>, vector<8x128xf32>
    %19 = arith.addf %18, %17 : vector<8x128xf32>
    %c0_7 = arith.constant 0 : index
    %c0_8 = arith.constant 0 : index
    %20 = vector.load %arg4[%c0_7, %c0_8] : memref<8x128xf32, #tpu.memory_space<vmem>>, vector<8x128xf32>
    tpu.vector_store %arg4[%c0_7, %c0_8], %19 {strides = array<i32>} : memref<8x128xf32, #tpu.memory_space<vmem>>, vector<8x128xf32>,
    return
  }
  func.func @transform_0(%arg0: i32, %arg1: i32) -> (i32, i32) {
    %c1_i32 = arith.constant 1 : i32
    %0 = arith.muli %arg0, %c1_i32 : i32
    %1 = arith.addi %0, %arg1 : i32
    %c0_i32 = arith.constant 0 : i32
    %c0_i32_0 = arith.constant 0 : i32
    return %1, %c0_i32 : i32, i32
  }
  func.func @transform_1(%arg0: i32, %arg1: i32) -> (i32, i32) {
    %c1_i32 = arith.constant 1 : i32
    %0 = arith.muli %arg0, %c1_i32 : i32
    %1 = arith.addi %0, %arg1 : i32
    %c0_i32 = arith.constant 0 : i32
    %c0_i32_0 = arith.constant 0 : i32
    return %1, %c0_i32 : i32, i32
  }
  func.func @transform_2(%arg0: i32, %arg1: i32) -> (i32, i32) {
    %c0_i32 = arith.constant 0 : i32
    %c0_i32_0 = arith.constant 0 : i32
    return %arg0, %c0_i32 : i32, i32
  }
}

</mosaic_0001>

<llo_original>
// kernel: charbonnier_loss.1
$region0: #{charbonnier_loss.1}
  #allocation0 [shape = 'u32[]', space=smem, size = 0x4, offset = 0x4, fixed_abs, tag = 'smem constant byte address 0x4 - core index']
  #allocation1 [shape = 'u32[144,128]{1,0:T(1,128)}', space=vmem, size = 0x12000, scoped, tag = 'internal scratch']
  %s0 = inlined_call_operand.vmem [shape: f32[16,128], index: 0, kind: input, shape index: {}]
  %s1 = inlined_call_operand.vmem [shape: f32[16,128], index: 1, kind: input, shape index: {}]
  %s2 = inlined_call_operand.vmem [shape: f32[8,128], index: 2, kind: output, shape index: {}]
  %s3 = sld [smem:[#allocation0]]
  $region22: #{charbonnier_loss.1} parent=0
    _
  %s5 = ssub.s32 1, %s3
  %s6 = scalar_select 0, %s5, %s3
  // Predicated region
  $region2: #{charbonnier_loss.1} parent=0 // pred_check
    _
  $region3: #{charbonnier_loss.1} parent=0 // pred_check_branch
    %8 = sbr.rel (0) target = $region5
  $region4: #{charbonnier_loss.1} parent=0 // pred_region
    %s9 = sadd.s32 0, 0
    %s10 = smul.u32 2, %s9
    %p11 = scmp.lt.s32.totalorder %s10, 1
    %s12 = scalar_select %p11, %s10, 1
    %s13 = smul.addr %s12, 8
    %s14 = scalar_lea.vmem %s0, %s13
    %s15 = sadd.s32 0, 0
    %s16 = smul.u32 2, %s15
  $region5: #{charbonnier_loss.1} parent=0 // pred_fallthru
    _
  // Predicated region
  $region6: #{charbonnier_loss.1} parent=0 // pred_check
    _
  $region7: #{charbonnier_loss.1} parent=0 // pred_check_branch
    %18 = sbr.rel (0) target = $region9
  $region8: #{charbonnier_loss.1} parent=0 // pred_region
    %s19 = sadd.s32 0, 0
    %s20 = smul.u32 2, %s19
    %p21 = scmp.lt.s32.totalorder %s20, 1
    %s22 = scalar_select %p21, %s20, 1
    %s23 = smul.addr %s22, 8
    %s24 = scalar_lea.vmem %s1, %s23
    %s25 = sadd.s32 0, 0
    %s26 = smul.u32 2, %s25
  $region9: #{charbonnier_loss.1} parent=0 // pred_fallthru
    _
  %s27 = sadd.s32 0, 0
  %s28 = smul.u32 2, %s27
  %p29 = scmp.lt.s32.totalorder %s28, 1
  %s30 = scalar_select %p29, %s28, 1
  %s31 = smul.addr %s30, 8
  %s32 = scalar_lea.vmem %s0, %s31
  %s33 = sadd.s32 0, 0
  %s34 = smul.u32 2, %s33
  %p35 = scmp.lt.s32.totalorder %s34, 1
  %s36 = scalar_select %p35, %s34, 1
  %s37 = smul.addr %s36, 8
  %s38 = scalar_lea.vmem %s1, %s37
  %s39 = sadd.s32 0, 0
  %s40 = smul.u32 2, %s39
  %p41 = scmp.lt.s32.totalorder %s40, 1
  %s42 = scalar_select %p41, %s40, 1
  %s43 = smul.addr %s42, 8
  %s44 = scalar_lea.vmem %s0, %s43
  %s45 = sadd.s32 0, 0
  %s46 = smul.u32 2, %s45
  %s47 = sadd.s32 0, 0
  %s48 = smul.u32 2, %s47
  %p49 = scmp.lt.s32.totalorder %s48, 1
  %s50 = scalar_select %p49, %s48, 1
  %s51 = smul.addr %s50, 8
  %s52 = scalar_lea.vmem %s1, %s51
  %s53 = sadd.s32 0, 0
  %s54 = smul.u32 2, %s53
  %p55 = scmp.eq.s32.totalorder 0, 0
  // Predicated region
  $region10: #{charbonnier_loss.1} parent=0 // pred_check
    %p56 = pneg %p55
  $region11: #{charbonnier_loss.1} parent=0 // pred_check_branch
    %58 = sbr.rel (%p56) target = $region13
  $region12: #{charbonnier_loss.1} parent=0 // pred_region
    %59 = vst [vmem:[%s2] sm:$0xff] 0.0
  $region13: #{charbonnier_loss.1} parent=0 // pred_fallthru
    _
  %v60 = vld [vmem:[%s44] sm:$0xff]
  %v61 = vld [vmem:[%s44 + $0x8] sm:$0xff]
  %v62 = vld [vmem:[%s52] sm:$0xff]
  %v63 = vld [vmem:[%s52 + $0x8] sm:$0xff]
  %v64 = vsub.f32 %v60, %v62
  %v65 = vsub.f32 %v61, %v63
  %v66 = vmul.f32 %v64, %v64
  %v67 = vmul.f32 %v65, %v65
  %v68 = vadd.f32 %v66, 1e-06
  %v69 = vadd.f32 %v67, 1e-06
  %v70 = vrsqrt.pop %v68
  %v71 = vmul.f32 %v68, %v70
  %vm72 = vcmp.eq.f32.partialorder %v68, inf
  %v73 = vsel %vm72, %v68, %v71
  %vm74 = vcmp.eq.f32.partialorder %v68, 0.0
  %v75 = vand.u32 %v68, 2147483648
  %v76 = vsel %vm74, %v75, %v73
  %v77 = vrsqrt.pop %v69
  %v78 = vmul.f32 %v69, %v77
  %vm79 = vcmp.eq.f32.partialorder %v69, inf
  %v80 = vsel %vm79, %v69, %v78
  %vm81 = vcmp.eq.f32.partialorder %v69, 0.0
  %v82 = vand.u32 %v69, 2147483648
  %v83 = vsel %vm81, %v82, %v80
  %v84 = vadd.f32 %v76, %v83
  %v85 = vadd.f32 %v84, 0.0
  %v86 = vld [vmem:[%s2] sm:$0xff]
  %v87 = vadd.f32 %v86, %v85
  %88 = vst [vmem:[%s2] sm:$0xff] %v87
  // Predicated region
  $region14: #{charbonnier_loss.1} parent=0 // pred_check
    _
  $region15: #{charbonnier_loss.1} parent=0 // pred_check_branch
    %90 = sbr.rel (0) target = $region17
  $region16: #{charbonnier_loss.1} parent=0 // pred_region
    _
  $region17: #{charbonnier_loss.1} parent=0 // pred_fallthru
    _
  // Predicated region
  $region18: #{charbonnier_loss.1} parent=0 // pred_check
    _
  $region19: #{charbonnier_loss.1} parent=0 // pred_check_branch
    %92 = sbr.rel (0) target = $region21
  $region20: #{charbonnier_loss.1} parent=0 // pred_region
    _
  $region21: #{charbonnier_loss.1} parent=0 // pred_fallthru
    _

</llo_original>
